<compile_context>
chip_gen: v5e
topology: v5e:2x2
jax: 0.10.0
libtpu: 0.0.40
codegen_flags: <defaults>
</compile_context>

<pallas_src>
import functools

import jax
import jax.numpy as jnp
from jax import lax
from jax.experimental import pallas as pl
from jax.experimental.pallas import tpu as pltpu


def _head_kernel(x_ref, w_ref, out_ref, *rest, scale, mask, return_wei,
                 matmul_dtype):
    # rest = (wei_ref, kv_scratch) if return_wei else (kv_scratch,)
    idx = 0
    wei_ref = None
    if return_wei:
        wei_ref = rest[idx]
        idx += 1
    kv_ref = rest[idx]                       # (bb, T, 2H) cached K|V

    bb, T, C = x_ref.shape
    tq, H = out_ref.shape[1], out_ref.shape[2]
    qi = pl.program_id(1)

    # Fused weight layout: [K | V | Q]  -> (C, 3H).
    w = w_ref[...].astype(matmul_dtype)

    # ---- K/V projection: once per batch block, cached across query tiles. ----
    @pl.when(qi == 0)
    def _():
        x_flat = x_ref[...].astype(matmul_dtype).reshape(bb * T, C)
        kv = jnp.dot(x_flat, w[:, :2 * H], preferred_element_type=jnp.float32)
        kv_ref[...] = kv.reshape(bb, T, 2 * H).astype(kv_ref.dtype)

    # ---- Q projection for this query tile (sliced from the resident x block). ----
    q_start = pl.multiple_of(qi * tq, tq)
    x_q = x_ref[:, pl.ds(q_start, tq), :].astype(matmul_dtype).reshape(bb * tq, C)
    q = jnp.dot(x_q, w[:, 2 * H:], preferred_element_type=jnp.float32)
    q = q.reshape(bb, tq, H) * scale         # fold 1/sqrt(H) into q (tq*H mults)

    k = kv_ref[:, :, :H]                     # (bb, T, H) in matmul_dtype
    v = kv_ref[:, :, H:]                     # (bb, T, H) in matmul_dtype

    # Scores: contract the head dim directly (no explicit k transpose / XLU;
    # verified pattern — same einsum the reference flash kernel uses).
    s = jnp.einsum('bqd,bkd->bqk', q.astype(matmul_dtype), k,
                   preferred_element_type=jnp.float32)        # (bb, tq, T) f32

    if mask:
        row = q_start + lax.broadcasted_iota(jnp.int32, (tq, 1), 0)
        col = lax.broadcasted_iota(jnp.int32, (1, T), 1)
        s = jnp.where((col <= row)[None], s, -jnp.inf)

    # Numerically stable softmax along the key axis.
    m = jnp.max(s, axis=-1, keepdims=True)
    e = jnp.exp(s - m)
    denom = jnp.sum(e, axis=-1, keepdims=True)
    if return_wei:
        # Exact normalization for the returned probabilities (and reuse for out).
        p = e / denom
        wei_ref[...] = p.astype(wei_ref.dtype)
    else:
        # Inference path: EUP approximate reciprocal (free bundle slot).
        p = e * pl.reciprocal(denom, approx=True)

    out = jnp.einsum('bqk,bkh->bqh', p.astype(matmul_dtype), v,
                     preferred_element_type=jnp.float32)       # (bb, tq, H)
    out_ref[...] = out.astype(out_ref.dtype)


def _vmem_budget_bytes():
    """Generation-aware scoped-VMEM target: ~3/4 of physical per-core VMEM.

    ~48 MiB on v7x (64 MiB physical), ~96 MiB on v5e/v6e (128 MiB physical).
    Conservative 48 MiB fallback (safe on every generation) if the query fails.
    """
    cap = 64 * 1024 * 1024
    try:
        info = pltpu.get_tpu_info()
        cap = int(getattr(info, "vmem_capacity_bytes", cap)) or cap
    except Exception:
        pass
    return (cap * 3) // 4


def head_forward(x, w_key, w_query, w_value, *, mask=True, return_wei=True,
                 batch_block=None, q_tile=None, matmul_dtype=None,
                 wei_dtype=None):
    """x: (B, T, C); weights: (C, H). Returns (out, wei) or just out.

    Each grid step processes (batch_block, q_tile) query rows against the full
    key/value sequence; K/V are projected once per batch block and cached in
    VMEM scratch across the query-tile axis.  matmul_dtype (default bfloat16)
    sets the MXU operand dtype (accumulation stays f32).  wei_dtype (default
    bfloat16) sets the attention-probability output dtype.
    """
    B, T, C = x.shape
    H = w_key.shape[1]
    scale = float(H) ** -0.5
    if matmul_dtype is None:
        matmul_dtype = jnp.bfloat16          # full-rate MXU, f32 accumulate
    if wei_dtype is None:
        wei_dtype = jnp.bfloat16 if return_wei else x.dtype

    # Fuse the projections into one (C, 3H) weight: [K | V | Q].
    w_kvq = jnp.concatenate([w_key, w_value, w_query], axis=1)

    vmem_budget = _vmem_budget_bytes()

    # --- query-tile size: largest multiple-of-8 divisor of T <= 512. ---
    if q_tile is None:
        if T <= 1024:
            q_tile = T
        else:
            q_tile = max((d for d in range(8, 513, 8) if T % d == 0), default=T)
    q_tile = min(q_tile, T)
    assert T % q_tile == 0, "q_tile must divide T"
    assert q_tile == T or q_tile % 8 == 0, "q_tile must be a multiple of 8"

    x_sz = jnp.dtype(x.dtype).itemsize
    mm_sz = jnp.dtype(matmul_dtype).itemsize
    wei_sz = jnp.dtype(wei_dtype).itemsize
    w_sz = jnp.dtype(w_kvq.dtype).itemsize

    # --- batch_block: budget the full per-step footprint against VMEM. ---
    if batch_block is None:
        per_row = (
            2 * T * C * x_sz               # x block (double-buffered)
            + T * 2 * H * mm_sz            # K/V cache scratch
            + T * 2 * H * 4                # f32 K/V projection intermediate
            + 3 * q_tile * T * 4           # s / e / p f32 score strips
            + 2 * q_tile * H * x_sz        # out block (double-buffered)
            + (2 * q_tile * T * wei_sz if return_wei else 0)
        )
        fixed = 2 * C * 3 * H * w_sz       # fused weight (double-buffered)
        budget = int(vmem_budget * 0.85) - fixed
        batch_block = max(1, min(B, budget // max(per_row, 1)))
        while B % batch_block:
            batch_block -= 1
    assert B % batch_block == 0, "batch_block must divide B"

    grid = (B // batch_block, T // q_tile)

    in_specs = [
        # Same block index across the query-tile axis -> stays resident,
        # no re-DMA while the cached K/V are reused.
        pl.BlockSpec((batch_block, T, C), lambda b, qi: (b, 0, 0)),
        pl.BlockSpec((C, 3 * H), lambda b, qi: (0, 0)),
    ]

    out_shape = [jax.ShapeDtypeStruct((B, T, H), x.dtype)]
    out_specs = [pl.BlockSpec((batch_block, q_tile, H), lambda b, qi: (b, qi, 0))]
    if return_wei:
        out_shape.append(jax.ShapeDtypeStruct((B, T, T), wei_dtype))
        out_specs.append(
            pl.BlockSpec((batch_block, q_tile, T), lambda b, qi: (b, qi, 0)))

    kernel = functools.partial(
        _head_kernel, scale=scale, mask=mask, return_wei=return_wei,
        matmul_dtype=matmul_dtype)

    results = pl.pallas_call(
        kernel,
        out_shape=out_shape,
        grid_spec=pltpu.PrefetchScalarGridSpec(
            num_scalar_prefetch=0,
            grid=grid,
            in_specs=in_specs,
            out_specs=out_specs,
            scratch_shapes=[
                # K|V cache, persists across the query-tile ("arbitrary") axis.
                pltpu.VMEM((batch_block, T, 2 * H), matmul_dtype),
            ],
        ),
        compiler_params=pltpu.CompilerParams(
            # Batch blocks are independent -> shard across TensorCores on v7x;
            # the query-tile axis carries the K/V scratch -> "arbitrary".
            dimension_semantics=("parallel", "arbitrary"),
            vmem_limit_bytes=int(vmem_budget),
        ),
    )(x, w_kvq)

    out = results[0]
    if return_wei:
        return out, results[1]
    return out


def _reference(x, wk, wq, wv, mask):
    H = wk.shape[1]
    k = x @ wk
    q = x @ wq
    v = x @ wv
    wei = (q @ jnp.swapaxes(k, -2, -1)) * (H ** -0.5)
    if mask:
        T = x.shape[1]
        tril = jnp.tril(jnp.ones((T, T)))
        wei = jnp.where(tril == 0, -jnp.inf, wei)
    wei = jax.nn.softmax(wei, axis=-1)
    out = wei @ v
    return out, wei


if __name__ == "__main__":
    # Small, module-consistent shapes.
    B, T, C, H = 2, 8, 32, 16    # batch, seq (== block_size), n_embd, head_size

    key = jax.random.PRNGKey(0)
    kx, kk, kq, kv = jax.random.split(key, 4)

    x = jax.random.normal(kx, (B, T, C), dtype=jnp.float32)
    # Deterministic linear weights (no bias), stored as (C, H).
    w_key = jax.random.normal(kk, (C, H), dtype=jnp.float32) * (C ** -0.5)
    w_query = jax.random.normal(kq, (C, H), dtype=jnp.float32) * (C ** -0.5)
    w_value = jax.random.normal(kv, (C, H), dtype=jnp.float32) * (C ** -0.5)

    ref_out, ref_wei = _reference(x, w_key, w_query, w_value, True)

    # 1) Defaults: bf16 MXU operands + bf16 wei writeback (f32 accumulation).
    out, wei = head_forward(x, w_key, w_query, w_value, mask=True)
    jax.block_until_ready((out, wei))
    assert jnp.allclose(out, ref_out, atol=5e-2, rtol=5e-2), "out mismatch (bf16)"
    assert jnp.allclose(wei.astype(jnp.float32), ref_wei, atol=5e-2, rtol=5e-2), \
        "wei mismatch (bf16)"

    # 2) Full-f32 path (exact softmax normalization on the wei path).
    out32, wei32 = head_forward(x, w_key, w_query, w_value, mask=True,
                                matmul_dtype=jnp.float32,
                                wei_dtype=jnp.float32)
    jax.block_until_ready((out32, wei32))
    assert jnp.allclose(out32, ref_out, atol=1e-2, rtol=1e-2), "out mismatch (f32)"
    assert jnp.allclose(wei32, ref_wei, atol=1e-2, rtol=1e-2), "wei mismatch (f32)"

    # 3) Inference path: no mask, skip the O(B*T^2) wei writeback entirely.
    ref_out_nm, _ = _reference(x, w_key, w_query, w_value, False)
    out_nm = head_forward(x, w_key, w_query, w_value, mask=False,
                          return_wei=False)
    jax.block_until_ready(out_nm)
    assert jnp.allclose(out_nm, ref_out_nm, atol=5e-2, rtol=5e-2), \
        "out mismatch (no-mask)"

    # 4) Multi-tile path: exercises the cached-K/V-across-query-tiles logic,
    #    the in-kernel pl.ds query slice and the batch grid axis
    #    (grid = (2, 2): batch_block=1, q_tile=8 over T=16).  f32 for a tight
    #    numerical check of the tiling itself.
    T2 = 16
    x2 = jax.random.normal(jax.random.PRNGKey(1), (B, T2, C), dtype=jnp.float32)
    ref_out2, ref_wei2 = _reference(x2, w_key, w_query, w_value, True)
    out2, wei2 = head_forward(x2, w_key, w_query, w_value, mask=True,
                              batch_block=1, q_tile=8,
                              matmul_dtype=jnp.float32,
                              wei_dtype=jnp.float32)
    jax.block_until_ready((out2, wei2))
    assert jnp.allclose(out2, ref_out2, atol=1e-2, rtol=1e-2), \
        "out mismatch (multi-tile)"
    assert jnp.allclose(wei2, ref_wei2, atol=1e-2, rtol=1e-2), \
        "wei mismatch (multi-tile)"

    print("KERNEL_OK")
</pallas_src>

<mosaic_0001>
module attributes {stable_mosaic.version = 11 : i64} {
  func.func @_head_kernel(%arg0: i32, %arg1: i32, %arg2: memref<2x8x32xf32, #tpu.memory_space<vmem>>, %arg3: memref<32x48xf32, #tpu.memory_space<vmem>>, %arg4: memref<2x8x16xf32, #tpu.memory_space<vmem>>, %arg5: memref<2x8x8xbf16, #tpu.memory_space<vmem>>, %arg6: memref<2x8x32xbf16, #tpu.memory_space<vmem>>) attributes {dimension_semantics = [#tpu.dimension_semantics<parallel>, #tpu.dimension_semantics<arbitrary>], iteration_bounds = array<i64: 1, 1>, scalar_prefetch = 0 : i64, scratch_operands = 1 : i64, tpu.core_type = #tpu.core_type<tc>, window_params = [{transform_indices = @transform_0, window_bounds = array<i64: 2, 8, 32>}, {pipeline_mode = #tpu.pipeline_mode<synchronous>, transform_indices = @transform_1, window_bounds = array<i64: 32, 48>}, {transform_indices = @transform_2, window_bounds = array<i64: 2, 8, 16>}, {transform_indices = @transform_3, window_bounds = array<i64: 2, 8, 8>}]} {
    %c0 = arith.constant 0 : index
    %c0_0 = arith.constant 0 : index
    %0 = vector.load %arg3[%c0, %c0_0] : memref<32x48xf32, #tpu.memory_space<vmem>>, vector<32x48xf32>
    %1 = arith.truncf %0 : vector<32x48xf32> to vector<32x48xbf16>
    %c0_i32 = arith.constant 0 : i32
    %2 = arith.cmpi eq, %arg1, %c0_i32 : i32
    %3 = arith.extui %2 : i1 to i32
    %c0_i32_1 = arith.constant 0 : i32
    %4 = arith.cmpi ne, %3, %c0_i32_1 : i32
    scf.if %4 {
      %c0_21 = arith.constant 0 : index
      %c0_22 = arith.constant 0 : index
      %c0_23 = arith.constant 0 : index
      %46 = vector.load %arg2[%c0_21, %c0_22, %c0_23] : memref<2x8x32xf32, #tpu.memory_space<vmem>>, vector<2x8x32xf32>
      %47 = arith.truncf %46 : vector<2x8x32xf32> to vector<2x8x32xbf16>
      %48 = vector.shape_cast %47 : vector<2x8x32xbf16> to vector<16x32xbf16>
      %49 = vector.extract_strided_slice %1 {offsets = [0, 0], sizes = [32, 32], strides = [1, 1]} : vector<32x48xbf16> to vector<32x32xbf16>
      %cst_24 = arith.constant dense<0.000000e+00> : vector<16x32xf32>
      %50 = tpu.matmul %48, %49, %cst_24 {dimension_numbers = #tpu.dot_dimension_numbers<[1], [0], [0], [1], [0, 0, 1, 1], [], []>} : vector<16x32xbf16>, vector<32x32xbf16>, vector<16x32xf32> -> vector<16x32xf32>
      %51 = vector.shape_cast %50 : vector<16x32xf32> to vector<2x8x32xf32>
      %52 = arith.truncf %51 : vector<2x8x32xf32> to vector<2x8x32xbf16>
      %c0_25 = arith.constant 0 : index
      %c0_26 = arith.constant 0 : index
      %c0_27 = arith.constant 0 : index
      %53 = vector.load %arg6[%c0_25, %c0_26, %c0_27] : memref<2x8x32xbf16, #tpu.memory_space<vmem>>, vector<2x8x32xbf16>
      tpu.vector_store %arg6[%c0_25, %c0_26, %c0_27], %52 {strides = array<i32>} : memref<2x8x32xbf16, #tpu.memory_space<vmem>>, vector<2x8x32xbf16>,
    } else {
    }
    %c8_i32 = arith.constant 8 : i32
    %5 = arith.muli %arg1, %c8_i32 : i32
    %6 = tpu.assume_multiple %5, 8 : i32
    %c0_2 = arith.constant 0 : index
    %7 = arith.index_cast %6 : i32 to index
    %c0_3 = arith.constant 0 : index
    %8 = vector.load %arg2[%c0_2, %7, %c0_3] : memref<2x8x32xf32, #tpu.memory_space<vmem>>, vector<2x8x32xf32>
    %9 = arith.truncf %8 : vector<2x8x32xf32> to vector<2x8x32xbf16>
    %10 = vector.shape_cast %9 : vector<2x8x32xbf16> to vector<16x32xbf16>
    %11 = vector.extract_strided_slice %1 {offsets = [0, 32], sizes = [32, 16], strides = [1, 1]} : vector<32x48xbf16> to vector<32x16xbf16>
    %cst = arith.constant dense<0.000000e+00> : vector<16x16xf32>
    %12 = tpu.matmul %10, %11, %cst {dimension_numbers = #tpu.dot_dimension_numbers<[1], [0], [0], [1], [0, 0, 1, 1], [], []>} : vector<16x32xbf16>, vector<32x16xbf16>, vector<16x16xf32> -> vector<16x16xf32>
    %13 = vector.shape_cast %12 : vector<16x16xf32> to vector<2x8x16xf32>
    %cst_4 = arith.constant 2.500000e-01 : f32
    %14 = vector.broadcast %cst_4 : f32 to vector<2x8x16xf32>
    %15 = arith.mulf %13, %14 : vector<2x8x16xf32>
    %c0_5 = arith.constant 0 : index
    %c0_6 = arith.constant 0 : index
    %c0_7 = arith.constant 0 : index
    %16 = vector.load %arg6[%c0_5, %c0_6, %c0_7] : memref<2x8x32xbf16, #tpu.memory_space<vmem>>, vector<2x8x16xbf16>
    %c0_8 = arith.constant 0 : index
    %c0_9 = arith.constant 0 : index
    %c16 = arith.constant 16 : index
    %17 = vector.load %arg6[%c0_8, %c0_9, %c16] : memref<2x8x32xbf16, #tpu.memory_space<vmem>>, vector<2x8x16xbf16>
    %18 = arith.truncf %15 : vector<2x8x16xf32> to vector<2x8x16xbf16>
    "tpu.trace_start"() <{level = 10 : i32, message = "bqd,bkd->bqk"}> : () -> ()
    %cst_10 = arith.constant dense<0.000000e+00> : vector<2x8x8xf32>
    %19 = tpu.matmul %18, %16, %cst_10 {dimension_numbers = #tpu.dot_dimension_numbers<[2], [2], [1], [1], [0, 0, 0, 1, 1, 1], [0], [0]>} : vector<2x8x16xbf16>, vector<2x8x16xbf16>, vector<2x8x8xf32> -> vector<2x8x8xf32>
    "tpu.trace_stop"() : () -> ()
    %20 = tpu.iota {dimensions = array<i32: 0>} : vector<8x1xi32>
    %21 = vector.broadcast %6 : i32 to vector<8x1xi32>
    %22 = arith.addi %21, %20 : vector<8x1xi32>
    %23 = tpu.iota {dimensions = array<i32: 1>} : vector<1x8xi32>
    %24 = vector.broadcast %23 : vector<1x8xi32> to vector<8x8xi32>
    %25 = vector.broadcast %22 : vector<8x1xi32> to vector<8x8xi32>
    %26 = arith.cmpi sle, %24, %25 : vector<8x8xi32>
    %27 = vector.shape_cast %26 : vector<8x8xi1> to vector<1x8x8xi1>
    %cst_11 = arith.constant 0xFF800000 : f32
    %28 = vector.shape_cast %27 : vector<1x8x8xi1> to vector<1x8x8xi1>
    %29 = vector.broadcast %28 : vector<1x8x8xi1> to vector<2x8x8xi1>
    %30 = vector.broadcast %cst_11 : f32 to vector<2x8x8xf32>
    %31 = arith.select %29, %19, %30 : vector<2x8x8xi1>, vector<2x8x8xf32>
    %cst_12 = arith.constant dense<0xFF800000> : vector<2x8xf32>
    %32 = vector.multi_reduction <maximumf>, %31, %cst_12 [2] : vector<2x8x8xf32> to vector<2x8xf32>
    %33 = vector.shape_cast %32 : vector<2x8xf32> to vector<2x8x1xf32>
    %34 = vector.broadcast %33 : vector<2x8x1xf32> to vector<2x8x8xf32>
    %35 = arith.subf %31, %34 : vector<2x8x8xf32>
    %36 = math.exp %35 : vector<2x8x8xf32>
    %cst_13 = arith.constant dense<0.000000e+00> : vector<2x8xf32>
    %37 = vector.multi_reduction <add>, %36, %cst_13 [2] : vector<2x8x8xf32> to vector<2x8xf32>
    %38 = vector.shape_cast %37 : vector<2x8xf32> to vector<2x8x1xf32>
    %39 = vector.broadcast %38 : vector<2x8x1xf32> to vector<2x8x8xf32>
    %40 = arith.divf %36, %39 : vector<2x8x8xf32>
    %41 = arith.truncf %40 : vector<2x8x8xf32> to vector<2x8x8xbf16>
    %c0_14 = arith.constant 0 : index
    %c0_15 = arith.constant 0 : index
    %c0_16 = arith.constant 0 : index
    %42 = vector.load %arg5[%c0_14, %c0_15, %c0_16] : memref<2x8x8xbf16, #tpu.memory_space<vmem>>, vector<2x8x8xbf16>
    tpu.vector_store %arg5[%c0_14, %c0_15, %c0_16], %41 {strides = array<i32>} : memref<2x8x8xbf16, #tpu.memory_space<vmem>>, vector<2x8x8xbf16>,
    %43 = arith.truncf %40 : vector<2x8x8xf32> to vector<2x8x8xbf16>
    "tpu.trace_start"() <{level = 10 : i32, message = "bqk,bkh->bqh"}> : () -> ()
    %cst_17 = arith.constant dense<0.000000e+00> : vector<2x8x16xf32>
    %44 = tpu.matmul %43, %17, %cst_17 {dimension_numbers = #tpu.dot_dimension_numbers<[2], [1], [1], [2], [0, 0, 0, 1, 1, 2], [0], [0]>} : vector<2x8x8xbf16>, vector<2x8x16xbf16>, vector<2x8x16xf32> -> vector<2x8x16xf32>
    "tpu.trace_stop"() : () -> ()
    %c0_18 = arith.constant 0 : index
    %c0_19 = arith.constant 0 : index
    %c0_20 = arith.constant 0 : index
    %45 = vector.load %arg4[%c0_18, %c0_19, %c0_20] : memref<2x8x16xf32, #tpu.memory_space<vmem>>, vector<2x8x16xf32>
    tpu.vector_store %arg4[%c0_18, %c0_19, %c0_20], %44 {strides = array<i32>} : memref<2x8x16xf32, #tpu.memory_space<vmem>>, vector<2x8x16xf32>,
    return
  }
  func.func @transform_0(%arg0: i32, %arg1: i32) -> (i32, i32, i32) {
    %c0_i32 = arith.constant 0 : i32
    %c0_i32_0 = arith.constant 0 : i32
    %c0_i32_1 = arith.constant 0 : i32
    return %arg0, %c0_i32, %c0_i32_0 : i32, i32, i32
  }
  func.func @transform_1(%arg0: i32, %arg1: i32) -> (i32, i32) {
    %c0_i32 = arith.constant 0 : i32
    %c0_i32_0 = arith.constant 0 : i32
    %c0_i32_1 = arith.constant 0 : i32
    return %c0_i32, %c0_i32_0 : i32, i32
  }
  func.func @transform_2(%arg0: i32, %arg1: i32) -> (i32, i32, i32) {
    %c0_i32 = arith.constant 0 : i32
    %c0_i32_0 = arith.constant 0 : i32
    return %arg0, %arg1, %c0_i32 : i32, i32, i32
  }
  func.func @transform_3(%arg0: i32, %arg1: i32) -> (i32, i32, i32) {
    %c0_i32 = arith.constant 0 : i32
    %c0_i32_0 = arith.constant 0 : i32
    return %arg0, %arg1, %c0_i32 : i32, i32, i32
  }
}

</mosaic_0001>

<llo_original>
// kernel: tpu_custom_call.1
$region0: #{tpu_custom_call.1}
  #allocation0 [shape = 'u32[]', space=smem, size = 0x4, offset = 0x4, fixed_abs, tag = 'smem constant byte address 0x4 - core index']
  #allocation1 [shape = 'u32[72,128]{1,0:T(1,128)}', space=vmem, size = 0x9000, scoped, tag = 'internal scratch']
  #allocation2 [shape = 'bf16[2,8,32]{2,1,0:T(8,128)(2,1)}', space=vmem, size = 0x1000, scoped, tag = 'scratch operand']
  %s0 = inlined_call_operand.hbm [shape: f32[2,8,32], index: 0, kind: input, shape index: {}]
  %s1 = inlined_call_operand.hbm [shape: f32[32,48], index: 1, kind: input, shape index: {}]
  %s2 = inlined_call_operand.hbm [shape: f32[2,8,16], index: 2, kind: output, shape index: {0}]
  %s3 = inlined_call_operand.hbm [shape: bf16[2,8,8], index: 3, kind: output, shape index: {1}]
  %4 = xla_tuple %s2, %s3
  %s5 = sld [smem:[#allocation0]]
  $region38: #{tpu_custom_call.1} parent=0
    _
  %s7 = ssub.s32 1, %s5
  %s8 = scalar_select 0, %s7, %s5
  $region1: #{tpu_custom_call.1} parent=0
    #allocation3 [shape = 'u8[8192]{0}', space=vmem, size = 0x2000, scoped, tag = 'input window, operand 0, single buffered']
    #allocation4 [shape = 's32[1]{0}', space=sflag, size = 0x4, scoped, tag = 'scoped memory for tpu_custom_call.1']
    #allocation5 [shape = 's32[1]{0}', space=sflag, size = 0x4, scoped, tag = 'scoped memory for tpu_custom_call.1']
    #allocation6 [shape = 'u8[16384]{0}', space=vmem, size = 0x4000, scoped, tag = 'input window, operand 1, single buffered']
    #allocation7 [shape = 's32[1]{0}', space=sflag, size = 0x4, scoped, tag = 'scoped memory for tpu_custom_call.1']
    #allocation8 [shape = 'u8[8192]{0}', space=vmem, size = 0x2000, scoped, tag = 'output window, operand 0, single buffered']
    #allocation9 [shape = 'u8[4096]{0}', space=vmem, size = 0x1000, scoped, tag = 'output window, operand 1, single buffered']
    #allocation10 [shape = 's32[1]{0}', space=sflag, size = 0x4, scoped, tag = 'scoped memory for tpu_custom_call.1']
    %9 = vsyncpa [#allocation4], 0
    %10 = vsyncpa [#allocation7], 0
    %11 = vsyncpa [#allocation5], 0
    %12 = vsyncpa [#allocation10], 0
    // Predicated region
    $region2: #{tpu_custom_call.1} parent=1 // pred_check
      _
    $region3: #{tpu_custom_call.1} parent=1 // pred_check_branch
      %14 = sbr.rel (0) target = $region5
    $region4: #{tpu_custom_call.1} parent=1 // pred_region
      %16 = vsyncadd [#allocation4], 0
      %s17 = sshll.u32 %s0, 4
      %s18 = int_to_ptr.hbm [resolvable:$true] %s17
      %s19 = sshll.u32 [#allocation3], 4
      %s20 = int_to_ptr.vmem [resolvable:$true] %s19
      %25 = dma.hbm_to_vmem [thread:$0]  %s18, 256, %s20, [#allocation4], 128, 128, 8
    $region5: #{tpu_custom_call.1} parent=1 // pred_fallthru
      _
    // Predicated region
    $region6: #{tpu_custom_call.1} parent=1 // pred_check
      _
    $region7: #{tpu_custom_call.1} parent=1 // pred_check_branch
      %27 = sbr.rel (0) target = $region9
    $region8: #{tpu_custom_call.1} parent=1 // pred_region
      %29 = vsyncadd [#allocation7], 0
      %s30 = sshll.u32 %s1, 4
      %s31 = int_to_ptr.hbm [resolvable:$true] %s30
      %s32 = sshll.u32 [#allocation6], 4
      %s33 = int_to_ptr.vmem [resolvable:$true] %s32
      %38 = dma.hbm_to_vmem [thread:$0]  %s31, 512, %s33, [#allocation7], 128, 128, 8
    $region9: #{tpu_custom_call.1} parent=1 // pred_fallthru
      _
    // Predicated region
    $region10: #{tpu_custom_call.1} parent=1 // pred_check
      _
    $region11: #{tpu_custom_call.1} parent=1 // pred_check_branch
      %40 = sbr.rel (0) target = $region13
    $region12: #{tpu_custom_call.1} parent=1 // pred_region
      %42 = dma.done [#allocation4], 256
    $region13: #{tpu_custom_call.1} parent=1 // pred_fallthru
      _
    // Predicated region
    $region14: #{tpu_custom_call.1} parent=1 // pred_check
      _
    $region15: #{tpu_custom_call.1} parent=1 // pred_check_branch
      %44 = sbr.rel (0) target = $region17
    $region16: #{tpu_custom_call.1} parent=1 // pred_region
      %46 = dma.done [#allocation7], 512
    $region17: #{tpu_custom_call.1} parent=1 // pred_fallthru
      _
    %v48 = vld [vmem:[#allocation6] sm:$0xff]
    %v49 = vld [vmem:[#allocation6 + $0x8] sm:$0xff]
    %v50 = vld [vmem:[#allocation6 + $0x10] sm:$0xff]
    %v51 = vld [vmem:[#allocation6 + $0x18] sm:$0xff]
    %v52 = vpack.c.bf16 %v48, %v48
    %v53 = vpack.c.bf16 %v49, %v49
    %v54 = vpack.c.bf16 %v50, %v50
    %v55 = vpack.c.bf16 %v51, %v51
    %p56 = scmp.eq.s32.totalorder 0, 0
    // Predicated region
    $region18: #{tpu_custom_call.1} parent=1 // pred_check
      %p57 = pneg %p56
    $region19: #{tpu_custom_call.1} parent=1 // pred_check_branch
      %59 = sbr.rel (%p57) target = $region21
    $region20: #{tpu_custom_call.1} parent=1 // pred_region
      %v60 = vld [vmem:[#allocation3] sm:$0xff]
      %v61 = vld [vmem:[#allocation3 + $0x8] sm:$0xff]
      %v62 = vpack.c.bf16 %v60, %v60
      %v63 = vpack.c.bf16 %v61, %v61
      %v66 = vunpack.c.l.b16 %v62
      %v67 = vunpack.c.l.b16 %v63
      %v68 = vpack.c.b16 %v67, %v66
      %v73 = vunpack.c.l.b16 %v52
      %v74 = vunpack.c.l.b16 %v53
      %v75 = vunpack.c.l.b16 %v54
      %v76 = vunpack.c.l.b16 %v55
      %v77 = vpack.c.b16 %v74, %v73
      %v78 = vpack.c.b16 %v76, %v75
      %vm81 = vcmask 261120
      %v83 = vsel %vm81, %v68, 0
      %85 = vmatpush.bf16.msra.mxu0 0
      %86 = vmatpush.bf16.msra.mxu0 0
      %87 = vmatpush.bf16.msra.mxu0 0
      %88 = vmatpush.bf16.msra.mxu0 0
      %89 = vmatpush.bf16.msra.mxu0 0
      %90 = vmatpush.bf16.msra.mxu0 0
      %91 = vmatpush.bf16.msra.mxu0 %v78
      %92 = vmatpush.bf16.msra.mxu0 %v77
      %93 = vmatmul.bf16.gmra.mxu0 %v83
      %v94 = vpop.f32.mrf.mxu0
      %v95 = vadd.f32 0.0, %v94
      %v96 = vpop.f32.mrf.mxu0
      %v97 = vadd.f32 0.0, %v96
      %98 = vdwg.mxu0
      %v99 = vpack.c.bf16 %v95, %v95
      %v100 = vpack.c.bf16 %v97, %v97
      %vm101 = vcmask 257024
      %102 = vst.msk [vmem:[#allocation2] sm:$0xf] %vm101, %v99
      %103 = vst.msk [vmem:[#allocation2 + $0x4] sm:$0xf] %vm101, %v100
    $region21: #{tpu_custom_call.1} parent=1 // pred_fallthru
      _
    %s104 = smul.u32 0, 8
    %s105 = scalar_lea.vmem [#allocation3], %s104
    %v106 = vld [vmem:[%s105] sm:$0xff]
    %v107 = vld [vmem:[%s105 + $0x8] sm:$0xff]
    %v108 = vpack.c.bf16 %v106, %v106
    %v109 = vpack.c.bf16 %v107, %v107
    %v112 = vunpack.c.l.b16 %v108
    %v113 = vunpack.c.l.b16 %v109
    %v114 = vpack.c.b16 %v113, %v112
    %v119 = vunpack.c.l.b16 %v52
    %v120 = vunpack.c.l.b16 %v53
    %v121 = vunpack.c.l.b16 %v54
    %v122 = vunpack.c.l.b16 %v55
    %v123 = vpack.c.b16 %v120, %v119
    %v124 = vpack.c.b16 %v122, %v121
    %125 = vrot.lane.b32.xlu0 %v123, 96
    %v126 = vpop.permute.xlu0 %125
    %127 = vrot.lane.b32.xlu0 %v124, 96
    %v128 = vpop.permute.xlu0 %127
    %vm131 = vcmask 261120
    %v133 = vsel %vm131, %v114, 0
    %135 = vmatpush.bf16.msra.mxu0 0
    %136 = vmatpush.bf16.msra.mxu0 0
    %137 = vmatpush.bf16.msra.mxu0 0
    %138 = vmatpush.bf16.msra.mxu0 0
    %139 = vmatpush.bf16.msra.mxu0 0
    %140 = vmatpush.bf16.msra.mxu0 0
    %141 = vmatpush.bf16.msra.mxu0 %v128
    %142 = vmatpush.bf16.msra.mxu0 %v126
    %143 = vmatmul.bf16.gmra.mxu0 %v133
    %v144 = vpop.f32.mrf.mxu0
    %v145 = vadd.f32 0.0, %v144
    %v146 = vpop.f32.mrf.mxu0
    %v147 = vadd.f32 0.0, %v146
    %148 = vdwg.mxu0
    %v149 = vmul.f32 %v145, 0.25
    %v150 = vmul.f32 %v147, 0.25
    %v151 = vld [vmem:[#allocation2] sm:$0xf]
    %v152 = vld [vmem:[#allocation2 + $0x4] sm:$0xf]
    %v153 = vpack.c.bf16 %v149, %v149
    %v154 = vpack.c.bf16 %v150, %v150
    %vm155 = vcmask 130048
    %v157 = vsel %vm155, %v153, 0
    %v160 = vsel %vm155, %v151, 0
    %162 = vmatpush.bf16.xpose.msra.mxu0 0
    %163 = vmatpush.bf16.xpose.msra.mxu0 0
    %164 = vmatpush.bf16.xpose.msra.mxu0 0
    %165 = vmatpush.bf16.xpose.msra.mxu0 0
    %166 = vmatpush.bf16.xpose.msra.mxu0 0
    %167 = vmatpush.bf16.xpose.msra.mxu0 0
    %168 = vmatpush.bf16.xpose.msra.mxu0 0
    %169 = vmatpush.bf16.xpose.msra.mxu0 %v160
    %170 = vmatmul.bf16.gmra.mxu0 %v157
    %v171 = vpop.f32.mrf.mxu0
    %v172 = vadd.f32 0.0, %v171
    %v173 = vpop.f32.mrf.mxu0
    %174 = vdwg.mxu0
    %v176 = vsel %vm155, %v154, 0
    %v179 = vsel %vm155, %v152, 0
    %181 = vmatpush.bf16.xpose.msra.mxu0 0
    %182 = vmatpush.bf16.xpose.msra.mxu0 0
    %183 = vmatpush.bf16.xpose.msra.mxu0 0
    %184 = vmatpush.bf16.xpose.msra.mxu0 0
    %185 = vmatpush.bf16.xpose.msra.mxu0 0
    %186 = vmatpush.bf16.xpose.msra.mxu0 0
    %187 = vmatpush.bf16.xpose.msra.mxu0 0
    %188 = vmatpush.bf16.xpose.msra.mxu0 %v179
    %189 = vmatmul.bf16.gmra.mxu0 %v176
    %v190 = vpop.f32.mrf.mxu0
    %v191 = vadd.f32 0.0, %v190
    %v192 = vpop.f32.mrf.mxu0
    %193 = vdwg.mxu0
    %v194 = vlaneseq
    %v195 = vshrl.u32 %v194, 7
    %v196 = vstv %s104
    %v197 = vadd.s32 %v196, %v195
    %v198 = vlaneseq
    %v199 = vand.u32 %v198, 127
    %vm200 = vcmp.le.s32.totalorder %v199, %v197
    %v201 = vsel %vm200, 1, 0
    %vm202 = vcmp.eq.s32.totalorder %v201, 1
    %v203 = vsel %vm202, %v172, -inf
    %v204 = vsel %vm202, %v191, -inf
    %vm205 = vcmask 64512
    %v206 = vsel %vm205, %v203, -inf
    %207 = vmax.xlane.f32.xlu0 %v206
    %v208 = vpop.xlane.xlu0 %207
    %v209 = vsel %vm205, %v204, -inf
    %210 = vmax.xlane.f32.xlu0 %v209
    %v211 = vpop.xlane.xlu0 %210
    %v212 = vsub.f32 %v203, %v208
    %v213 = vsub.f32 %v204, %v211
    %v214 = vmul.f32 %v212, 1.442695
    %v215 = vpow.pop %v214
    %v216 = vmul.f32 %v213, 1.442695
    %v217 = vpow.pop %v216
    %v218 = vsel %vm205, %v215, 0.0
    %219 = vadd.xlane.f32.xlu0 %v218
    %v220 = vpop.xlane.xlu0 %219
    %v221 = vsel %vm205, %v217, 0.0
    %222 = vadd.xlane.f32.xlu0 %v221
    %v223 = vpop.xlane.xlu0 %222
    %v224 = vrcp.pop %v220
    %v225 = vmul.f32 %v220, %v224
    %v226 = vsub.f32 1.0, %v225
    %v227 = vmul.f32 %v224, %v226
    %v228 = vadd.f32 %v224, %v227
    %vm229 = vweird.f32 %v220
    %vm230 = vweird.f32 %v224
    %vm231 = vmor %vm229, %vm230
    %v232 = vsel %vm231, %v224, %v228
    %v233 = vand.u32 2147483647, %v220
    %vm234 = vcmp.eq.f32.partialorder %v233, 8.507059e+37
    %v235 = vand.u32 %v220, 2147483648
    %v236 = vor.u32 1.1754944e-38, %v235
    %v237 = vsel %vm234, %v236, %v232
    %v238 = vmul.f32 %v215, %v237
    %v239 = vrcp.pop %v223
    %v240 = vmul.f32 %v223, %v239
    %v241 = vsub.f32 1.0, %v240
    %v242 = vmul.f32 %v239, %v241
    %v243 = vadd.f32 %v239, %v242
    %vm244 = vweird.f32 %v223
    %vm245 = vweird.f32 %v239
    %vm246 = vmor %vm244, %vm245
    %v247 = vsel %vm246, %v239, %v243
    %v248 = vand.u32 2147483647, %v223
    %vm249 = vcmp.eq.f32.partialorder %v248, 8.507059e+37
    %v250 = vand.u32 %v223, 2147483648
    %v251 = vor.u32 1.1754944e-38, %v250
    %v252 = vsel %vm249, %v251, %v247
    %v253 = vmul.f32 %v217, %v252
    %v254 = vpack.c.bf16 %v238, %v238
    %v255 = vpack.c.bf16 %v253, %v253
    %vm256 = vcmask 60416
    %257 = vst.msk [vmem:[#allocation9] sm:$0xf] %vm256, %v254
    %258 = vst.msk [vmem:[#allocation9 + $0x4] sm:$0xf] %vm256, %v255
    %v260 = vunpack.c.l.b16 %v151
    %v261 = vpack.c.b16 %v260, %v260
    %262 = vrot.lane.b32.xlu0 %v261, 112
    %v263 = vpop.permute.xlu0 %262
    %v265 = vsel %vm205, %v254, 0
    %vm267 = vcmask 1043456
    %v269 = vsel %vm267, %v263, 0
    %271 = vmatpush.bf16.msra.mxu0 0
    %272 = vmatpush.bf16.msra.mxu0 0
    %273 = vmatpush.bf16.msra.mxu0 0
    %274 = vmatpush.bf16.msra.mxu0 0
    %275 = vmatpush.bf16.msra.mxu0 0
    %276 = vmatpush.bf16.msra.mxu0 0
    %277 = vmatpush.bf16.msra.mxu0 0
    %278 = vmatpush.bf16.msra.mxu0 %v269
    %279 = vmatmul.bf16.gmra.mxu0 %v265
    %v280 = vpop.f32.mrf.mxu0
    %v281 = vadd.f32 0.0, %v280
    %v282 = vpop.f32.mrf.mxu0
    %283 = vdwg.mxu0
    %v285 = vunpack.c.l.b16 %v152
    %v286 = vpack.c.b16 %v285, %v285
    %287 = vrot.lane.b32.xlu0 %v286, 112
    %v288 = vpop.permute.xlu0 %287
    %v290 = vsel %vm205, %v255, 0
    %v293 = vsel %vm267, %v288, 0
    %295 = vmatpush.bf16.msra.mxu0 0
    %296 = vmatpush.bf16.msra.mxu0 0
    %297 = vmatpush.bf16.msra.mxu0 0
    %298 = vmatpush.bf16.msra.mxu0 0
    %299 = vmatpush.bf16.msra.mxu0 0
    %300 = vmatpush.bf16.msra.mxu0 0
    %301 = vmatpush.bf16.msra.mxu0 0
    %302 = vmatpush.bf16.msra.mxu0 %v293
    %303 = vmatmul.bf16.gmra.mxu0 %v290
    %v304 = vpop.f32.mrf.mxu0
    %v305 = vadd.f32 0.0, %v304
    %v306 = vpop.f32.mrf.mxu0
    %307 = vdwg.mxu0
    %308 = vst.msk [vmem:[#allocation8] sm:$0xff] %vm155, %v281
    %309 = vst.msk [vmem:[#allocation8 + $0x8] sm:$0xff] %vm155, %v305
    // Predicated region
    $region22: #{tpu_custom_call.1} parent=1 // pred_check
      _
    $region23: #{tpu_custom_call.1} parent=1 // pred_check_branch
      %311 = sbr.rel (0) target = $region25
    $region24: #{tpu_custom_call.1} parent=1 // pred_region
      %313 = vsyncadd [#allocation5], 0
      %s314 = sshll.u32 [#allocation8], 4
      %s315 = int_to_ptr.vmem [resolvable:$true] %s314
      %s316 = sshll.u32 %s2, 4
      %s317 = int_to_ptr.hbm [resolvable:$true] %s316
      %322 = dma.vmem_to_hbm [thread:$0]  %s315, 256, %s317, [#allocation5], 128, 128, 8
    $region25: #{tpu_custom_call.1} parent=1 // pred_fallthru
      _
    // Predicated region
    $region26: #{tpu_custom_call.1} parent=1 // pred_check
      _
    $region27: #{tpu_custom_call.1} parent=1 // pred_check_branch
      %324 = sbr.rel (0) target = $region29
    $region28: #{tpu_custom_call.1} parent=1 // pred_region
      %326 = vsyncadd [#allocation10], 0
      %s327 = sshll.u32 [#allocation9], 4
      %s328 = int_to_ptr.vmem [resolvable:$true] %s327
      %s329 = sshll.u32 %s3, 4
      %s330 = int_to_ptr.hbm [resolvable:$true] %s329
      %335 = dma.vmem_to_hbm [thread:$0]  %s328, 128, %s330, [#allocation10], 64, 64, 4
    $region29: #{tpu_custom_call.1} parent=1 // pred_fallthru
      _
    // Predicated region
    $region30: #{tpu_custom_call.1} parent=1 // pred_check
      _
    $region31: #{tpu_custom_call.1} parent=1 // pred_check_branch
      %337 = sbr.rel (0) target = $region33
    $region32: #{tpu_custom_call.1} parent=1 // pred_region
      %339 = dma.done [#allocation5], 256
    $region33: #{tpu_custom_call.1} parent=1 // pred_fallthru
      _
    // Predicated region
    $region34: #{tpu_custom_call.1} parent=1 // pred_check
      _
    $region35: #{tpu_custom_call.1} parent=1 // pred_check_branch
      %341 = sbr.rel (0) target = $region37
    $region36: #{tpu_custom_call.1} parent=1 // pred_region
      %343 = dma.done [#allocation10], 128
    $region37: #{tpu_custom_call.1} parent=1 // pred_fallthru
      _
    %344 = vsyncpa [#allocation4], 1
    %345 = vsyncpa [#allocation7], 1
    %346 = vsyncpa [#allocation5], 1
    %347 = vsyncpa [#allocation10], 1

</llo_original>
